<compile_context>
chip_gen: v6e
topology: v6e:2x2x1
jax: 0.10.0
libtpu: 0.0.40
codegen_flags: <defaults>
</compile_context>

<pallas_src>
import functools

import jax
import jax.numpy as jnp
from jax import lax
from jax.experimental import pallas as pl
from jax.experimental.pallas import tpu as pltpu


# ---------------------------------------------------------------------------
# Trace-time hardware queries (guarded so the code also runs where unavailable).
# ---------------------------------------------------------------------------
def _physical_vmem_bytes() -> int:
    try:
        return int(pltpu.get_tpu_info().vmem_capacity_bytes)
    except Exception:
        return 64 << 20  # conservative: v7x per-TensorCore VMEM


def _num_tensorcores() -> int:
    try:
        info = pltpu.get_tpu_info()
        for attr in ("num_tensorcores", "tensorcore_count", "num_cores", "core_count"):
            v = getattr(info, attr, None)
            if v:
                return int(v)
    except Exception:
        pass
    return 1  # v5e/v6e: one TensorCore per chip; conservative default


# ---------------------------------------------------------------------------
# Kernels
# ---------------------------------------------------------------------------
def _make_resident_kernel(precision):
    # Weights fully resident in VMEM; batch streamed through a 1-D "parallel" grid.
    def kernel(x_ref, w1_ref, b1_ref, w2_ref, b2_ref, o_ref):
        # x:(bm,D)  w1/w2:(D,D) pre-transposed  b1/b2:(1,D) f32
        h = jnp.dot(x_ref[...], w1_ref[...],
                    preferred_element_type=jnp.float32, precision=precision)
        h = jnp.maximum(h + b1_ref[...], 0.0)                       # f32 epilogue
        y = jnp.dot(h.astype(w2_ref.dtype), w2_ref[...],
                    preferred_element_type=jnp.float32, precision=precision)
        o_ref[...] = (y + b2_ref[...]).astype(o_ref.dtype)          # single cast at store
    return kernel


def _make_tiled_kernel(precision):
    # grid = (batch tiles, hidden-column tiles).  The hidden axis is a reduction for the
    # second matmul -> f32 VMEM accumulator, init/finalize via pl.when (P3 pattern).
    def kernel(x_ref, w1_ref, b1_ref, w2_ref, b2_ref, o_ref, acc_ref):
        n = pl.program_id(1)

        @pl.when(n == 0)
        def _():
            acc_ref[...] = jnp.broadcast_to(b2_ref[...], acc_ref.shape)

        h = jnp.dot(x_ref[...], w1_ref[...],
                    preferred_element_type=jnp.float32, precision=precision)
        h = jnp.maximum(h + b1_ref[...], 0.0)
        acc_ref[...] += jnp.dot(h.astype(w2_ref.dtype), w2_ref[...],
                                preferred_element_type=jnp.float32,
                                precision=precision)

        @pl.when(n == pl.num_programs(1) - 1)
        def _():
            o_ref[...] = acc_ref[...].astype(o_ref.dtype)
    return kernel


# ---------------------------------------------------------------------------
# Tiling helpers
# ---------------------------------------------------------------------------
def _pick_block_m(batch, block_m, itemsize, n_cores):
    mult = 16 if itemsize < 4 else 8          # bf16 sublane tile is (16, 128)
    if batch < block_m:
        bm = batch                            # full-extent block is always legal
    else:
        bm = max((block_m // mult) * mult, mult)
    # Only split a single-step batch when there are >=2 TensorCores (v7x megacore);
    # on v5e/v6e the grid is serial and splitting just adds per-step overhead.
    if (n_cores >= 2 and pl.cdiv(batch, bm) < 2
            and bm >= 2 * mult and (bm // 2) % mult == 0):
        bm //= 2
    return bm


def _pick_tn(D):
    for t in (512, 256, 128):
        if D % t == 0 and t < D:
            return t
    return None


# ---------------------------------------------------------------------------
# Entry point
# ---------------------------------------------------------------------------
@functools.partial(jax.jit, static_argnames=("block_m", "compute_dtype", "force_tiled"))
def _encode_impl(x, w1t, b1, w2t, b2, *, block_m, compute_dtype, force_tiled):
    B, D = x.shape
    out_dtype = x.dtype
    cdt = jnp.dtype(compute_dtype)
    wbytes = cdt.itemsize
    obytes = jnp.dtype(out_dtype).itemsize
    # If the user insists on f32 storage, make the MXU actually do f32-grade math.
    precision = lax.Precision.HIGHEST if wbytes >= 4 else None

    # bf16 storage for the MXU operands (halves DMA + VMEM); f32 biases for the epilogue.
    x_c = x.astype(cdt)
    w1_c = w1t.astype(cdt)
    w2_c = w2t.astype(cdt)
    b1_f = b1.astype(jnp.float32)
    b2_f = b2.astype(jnp.float32)

    n_cores = _num_tensorcores()
    vmem_cap = int(0.85 * _physical_vmem_bytes())     # never exceed physical VMEM
    bm = _pick_block_m(B, block_m, wbytes, n_cores)
    grid_m = pl.cdiv(B, bm)

    # Resident-weight footprint: single-buffered weights + biases, double-buffered x/out
    # tiles, f32 hidden + output intermediates.
    resident_need = (2 * D * D * wbytes + 2 * D * 4
                     + 2 * bm * D * wbytes
                     + 2 * bm * D * obytes
                     + 2 * bm * D * 4)

    tn = _pick_tn(D)
    use_tiled = bool(force_tiled) or (resident_need > vmem_cap)
    if use_tiled and tn is None:
        use_tiled = False   # cannot tile the hidden dim cleanly; keep weights resident

    cost = pl.CostEstimate(
        flops=4 * B * D * D,                                   # two (B,D)@(D,D) matmuls
        transcendentals=0,
        bytes_accessed=B * D * (wbytes + obytes) + 2 * D * D * wbytes + 2 * D * 4,
    )

    if not use_tiled:
        x_kwargs = {}
        if D <= 256 and grid_m >= 3:
            # Small-D steps are latency-bound: deepen the streamed-x pipeline.
            x_kwargs = dict(pipeline_mode=pl.Buffered(3))
        vmem_limit = int(min(max(resident_need + (8 << 20), 32 << 20), vmem_cap))
        return pl.pallas_call(
            _make_resident_kernel(precision),
            out_shape=jax.ShapeDtypeStruct((B, D), out_dtype),
            grid_spec=pltpu.PrefetchScalarGridSpec(
                num_scalar_prefetch=0,
                grid=(grid_m,),
                in_specs=[
                    pl.BlockSpec((bm, D), lambda i: (i, 0), **x_kwargs),     # x (streamed)
                    pl.BlockSpec((D, D), lambda i: (0, 0),
                                 pipeline_mode=pl.Buffered(1)),              # W1^T resident
                    pl.BlockSpec((1, D), lambda i: (0, 0),
                                 pipeline_mode=pl.Buffered(1)),              # b1 resident
                    pl.BlockSpec((D, D), lambda i: (0, 0),
                                 pipeline_mode=pl.Buffered(1)),              # W2^T resident
                    pl.BlockSpec((1, D), lambda i: (0, 0),
                                 pipeline_mode=pl.Buffered(1)),              # b2 resident
                ],
                out_specs=pl.BlockSpec((bm, D), lambda i: (i, 0)),
            ),
            compiler_params=pltpu.CompilerParams(
                dimension_semantics=("parallel",),
                vmem_limit_bytes=vmem_limit,
            ),
            cost_estimate=cost,
        )(x_c, w1_c, b1_f, w2_c, b2_f)

    # ---- Tiled-weights path (large D; keeps v7x's 64 MiB VMEM happy) ----
    grid = (grid_m, D // tn)
    tiled_need = (2 * 2 * D * tn * wbytes     # W1/W2 column tiles, double-buffered
                  + 2 * bm * D * wbytes       # x tiles
                  + 2 * bm * D * obytes       # out tiles
                  + bm * D * 4                # f32 accumulator scratch
                  + 2 * (tn + D) * 4)         # biases
    vmem_limit = int(min(max(tiled_need + (8 << 20), 32 << 20), vmem_cap))
    return pl.pallas_call(
        _make_tiled_kernel(precision),
        out_shape=jax.ShapeDtypeStruct((B, D), out_dtype),
        grid_spec=pltpu.PrefetchScalarGridSpec(
            num_scalar_prefetch=0,
            grid=grid,
            in_specs=[
                pl.BlockSpec((bm, D), lambda i, n: (i, 0)),                  # x
                pl.BlockSpec((D, tn), lambda i, n: (0, n)),                  # W1^T col tile
                pl.BlockSpec((1, tn), lambda i, n: (0, n)),                  # b1 col tile
                pl.BlockSpec((tn, D), lambda i, n: (n, 0)),                  # W2^T row tile
                pl.BlockSpec((1, D), lambda i, n: (0, 0),
                             pipeline_mode=pl.Buffered(1)),                  # b2 resident
            ],
            out_specs=pl.BlockSpec((bm, D), lambda i, n: (i, 0)),
            scratch_shapes=[pltpu.VMEM((bm, D), jnp.float32)],
        ),
        compiler_params=pltpu.CompilerParams(
            dimension_semantics=("parallel", "arbitrary"),
            vmem_limit_bytes=vmem_limit,
        ),
        cost_estimate=cost,
    )(x_c, w1_c, b1_f, w2_c, b2_f)


def contrastive_encode(x, w1t, b1, w2t, b2, *, block_m=512,
                       compute_dtype=jnp.bfloat16, force_tiled=False):
    """ContrastiveEncode forward: relu(x @ w1t + b1) @ w2t + b2.

    x: (B, D).  w1t/w2t: (D, D), already transposed to (in, out).  b1/b2: (1, D).
    compute_dtype: MXU/storage dtype for x and weights (bf16 default, f32 accumulation);
    pass jnp.float32 for full-f32 numerics (uses Precision.HIGHEST on the MXU).
    """
    return _encode_impl(x, w1t, b1, w2t, b2, block_m=block_m,
                        compute_dtype=jnp.dtype(compute_dtype),
                        force_tiled=force_tiled)


# ---------------------------------------------------------------------------
# Reference + init (mimics torch.nn.Linear defaults: U(-1/sqrt(in), 1/sqrt(in)))
# ---------------------------------------------------------------------------
def init_params(key, dim_feat, dtype=jnp.float32):
    k1, k2, k3, k4 = jax.random.split(key, 4)
    bound = 1.0 / jnp.sqrt(dim_feat)
    # PyTorch W is (out, in); keep (in, out) = W^T for the kernel.
    w1t = jax.random.uniform(k1, (dim_feat, dim_feat), dtype, -bound, bound)
    b1 = jax.random.uniform(k2, (1, dim_feat), dtype, -bound, bound)
    w2t = jax.random.uniform(k3, (dim_feat, dim_feat), dtype, -bound, bound)
    b2 = jax.random.uniform(k4, (1, dim_feat), dtype, -bound, bound)
    return w1t, b1, w2t, b2


def reference(x, w1t, b1, w2t, b2):
    h = jnp.maximum(x @ w1t + b1, 0.0)
    return h @ w2t + b2


if __name__ == "__main__":
    key = jax.random.PRNGKey(0)
    kx, kp, kx2, kp2 = jax.random.split(key, 4)

    # --- resident-weights path (typical small D) ---
    batch, dim_feat = 32, 128
    x = jax.random.normal(kx, (batch, dim_feat), jnp.float32)
    w1t, b1, w2t, b2 = init_params(kp, dim_feat)

    out = jax.block_until_ready(contrastive_encode(x, w1t, b1, w2t, b2))
    assert out.shape == (batch, dim_feat) and out.dtype == x.dtype

    ref_f32 = reference(x, w1t, b1, w2t, b2)
    ref_bf16 = reference(x.astype(jnp.bfloat16).astype(jnp.float32),
                         w1t.astype(jnp.bfloat16).astype(jnp.float32), b1,
                         w2t.astype(jnp.bfloat16).astype(jnp.float32), b2)
    assert jnp.allclose(out, ref_f32, atol=5e-2, rtol=5e-2), "mismatch vs f32 reference"
    assert jnp.allclose(out, ref_bf16, atol=1e-2, rtol=1e-2), "mismatch vs bf16 reference"

    # --- tiled-weights fallback path (auto-selected for large D / v7x VMEM) ---
    batch2, dim2 = 16, 256
    x2 = jax.random.normal(kx2, (batch2, dim2), jnp.float32)
    p2 = init_params(kp2, dim2)
    out2 = jax.block_until_ready(contrastive_encode(x2, *p2, force_tiled=True))
    ref2 = reference(x2, *p2)
    assert out2.shape == (batch2, dim2)
    assert jnp.allclose(out2, ref2, atol=5e-2, rtol=5e-2), "tiled path mismatch"

    print("KERNEL_OK")
</pallas_src>

<mosaic_0001>
module attributes {stable_mosaic.version = 11 : i64} {
  func.func @kernel(%arg0: i32, %arg1: memref<32x128xbf16, #tpu.memory_space<vmem>>, %arg2: memref<128x128xbf16, #tpu.memory_space<vmem>>, %arg3: memref<1x128xf32, #tpu.memory_space<vmem>>, %arg4: memref<128x128xbf16, #tpu.memory_space<vmem>>, %arg5: memref<1x128xf32, #tpu.memory_space<vmem>>, %arg6: memref<32x128xf32, #tpu.memory_space<vmem>>) attributes {dimension_semantics = [#tpu.dimension_semantics<parallel>], iteration_bounds = array<i64: 1>, scalar_prefetch = 0 : i64, scratch_operands = 0 : i64, tpu.core_type = #tpu.core_type<tc>, window_params = [{transform_indices = @transform_0, window_bounds = array<i64: 32, 128>}, {pipeline_mode = #tpu.pipeline_mode<synchronous>, transform_indices = @transform_1, window_bounds = array<i64: 128, 128>}, {pipeline_mode = #tpu.pipeline_mode<synchronous>, transform_indices = @transform_2, window_bounds = array<i64: 1, 128>}, {pipeline_mode = #tpu.pipeline_mode<synchronous>, transform_indices = @transform_3, window_bounds = array<i64: 128, 128>}, {pipeline_mode = #tpu.pipeline_mode<synchronous>, transform_indices = @transform_4, window_bounds = array<i64: 1, 128>}, {transform_indices = @transform_5, window_bounds = array<i64: 32, 128>}]} {
    %c0 = arith.constant 0 : index
    %c0_0 = arith.constant 0 : index
    %0 = vector.load %arg1[%c0, %c0_0] : memref<32x128xbf16, #tpu.memory_space<vmem>>, vector<32x128xbf16>
    %c0_1 = arith.constant 0 : index
    %c0_2 = arith.constant 0 : index
    %1 = vector.load %arg2[%c0_1, %c0_2] : memref<128x128xbf16, #tpu.memory_space<vmem>>, vector<128x128xbf16>
    %cst = arith.constant dense<0.000000e+00> : vector<32x128xf32>
    %2 = tpu.matmul %0, %1, %cst {dimension_numbers = #tpu.dot_dimension_numbers<[1], [0], [0], [1], [0, 0, 1, 1], [], []>} : vector<32x128xbf16>, vector<128x128xbf16>, vector<32x128xf32> -> vector<32x128xf32>
    %c0_3 = arith.constant 0 : index
    %c0_4 = arith.constant 0 : index
    %3 = vector.load %arg3[%c0_3, %c0_4] : memref<1x128xf32, #tpu.memory_space<vmem>>, vector<1x128xf32>
    %4 = vector.broadcast %3 : vector<1x128xf32> to vector<32x128xf32>
    %5 = arith.addf %2, %4 : vector<32x128xf32>
    %cst_5 = arith.constant 0.000000e+00 : f32
    %6 = vector.broadcast %cst_5 : f32 to vector<32x128xf32>
    %7 = arith.maximumf %5, %6 : vector<32x128xf32>
    %8 = arith.truncf %7 : vector<32x128xf32> to vector<32x128xbf16>
    %c0_6 = arith.constant 0 : index
    %c0_7 = arith.constant 0 : index
    %9 = vector.load %arg4[%c0_6, %c0_7] : memref<128x128xbf16, #tpu.memory_space<vmem>>, vector<128x128xbf16>
    %cst_8 = arith.constant dense<0.000000e+00> : vector<32x128xf32>
    %10 = tpu.matmul %8, %9, %cst_8 {dimension_numbers = #tpu.dot_dimension_numbers<[1], [0], [0], [1], [0, 0, 1, 1], [], []>} : vector<32x128xbf16>, vector<128x128xbf16>, vector<32x128xf32> -> vector<32x128xf32>
    %c0_9 = arith.constant 0 : index
    %c0_10 = arith.constant 0 : index
    %11 = vector.load %arg5[%c0_9, %c0_10] : memref<1x128xf32, #tpu.memory_space<vmem>>, vector<1x128xf32>
    %12 = vector.broadcast %11 : vector<1x128xf32> to vector<32x128xf32>
    %13 = arith.addf %10, %12 : vector<32x128xf32>
    %c0_11 = arith.constant 0 : index
    %c0_12 = arith.constant 0 : index
    %14 = vector.load %arg6[%c0_11, %c0_12] : memref<32x128xf32, #tpu.memory_space<vmem>>, vector<32x128xf32>
    tpu.vector_store %arg6[%c0_11, %c0_12], %13 {strides = array<i32>} : memref<32x128xf32, #tpu.memory_space<vmem>>, vector<32x128xf32>,
    return
  }
  func.func @transform_0(%arg0: i32) -> (i32, i32) {
    %c0_i32 = arith.constant 0 : i32
    %c0_i32_0 = arith.constant 0 : i32
    return %arg0, %c0_i32 : i32, i32
  }
  func.func @transform_1(%arg0: i32) -> (i32, i32) {
    %c0_i32 = arith.constant 0 : i32
    %c0_i32_0 = arith.constant 0 : i32
    %c0_i32_1 = arith.constant 0 : i32
    return %c0_i32, %c0_i32_0 : i32, i32
  }
  func.func @transform_2(%arg0: i32) -> (i32, i32) {
    %c0_i32 = arith.constant 0 : i32
    %c0_i32_0 = arith.constant 0 : i32
    %c0_i32_1 = arith.constant 0 : i32
    return %c0_i32, %c0_i32_0 : i32, i32
  }
  func.func @transform_3(%arg0: i32) -> (i32, i32) {
    %c0_i32 = arith.constant 0 : i32
    %c0_i32_0 = arith.constant 0 : i32
    %c0_i32_1 = arith.constant 0 : i32
    return %c0_i32, %c0_i32_0 : i32, i32
  }
  func.func @transform_4(%arg0: i32) -> (i32, i32) {
    %c0_i32 = arith.constant 0 : i32
    %c0_i32_0 = arith.constant 0 : i32
    %c0_i32_1 = arith.constant 0 : i32
    return %c0_i32, %c0_i32_0 : i32, i32
  }
  func.func @transform_5(%arg0: i32) -> (i32, i32) {
    %c0_i32 = arith.constant 0 : i32
    %c0_i32_0 = arith.constant 0 : i32
    return %arg0, %c0_i32 : i32, i32
  }
}

</mosaic_0001>

<llo_original>
// kernel: _encode_impl.1
$region0: #{_encode_impl.1}
  #allocation0 [shape = 'u32[]', space=smem, size = 0x4, offset = 0x4, fixed_abs, tag = 'smem constant byte address 0x4 - core index']
  #allocation1 [shape = 'u32[144,128]{1,0:T(1,128)}', space=vmem, size = 0x12000, scoped, tag = 'internal scratch']
  %s0 = inlined_call_operand.vmem [shape: bf16[32,128], index: 0, kind: input, shape index: {}]
  %s1 = inlined_call_operand.vmem [shape: bf16[128,128], index: 1, kind: input, shape index: {}]
  %s2 = inlined_call_operand.vmem [shape: f32[1,128], index: 2, kind: input, shape index: {}]
  %s3 = inlined_call_operand.vmem [shape: bf16[128,128], index: 3, kind: input, shape index: {}]
  %s4 = inlined_call_operand.vmem [shape: f32[1,128], index: 4, kind: input, shape index: {}]
  %s5 = inlined_call_operand.hbm [shape: f32[32,128], index: 5, kind: output, shape index: {}]
  %s6 = sld [smem:[#allocation0]]
  $region30: #{_encode_impl.1} parent=0
    _
  %s8 = ssub.s32 1, %s6
  %s9 = scalar_select 0, %s8, %s6
  $region1: #{_encode_impl.1} parent=0
    #allocation2 [shape = 'u8[16384]{0}', space=vmem, size = 0x4000, scoped, tag = 'output window, operand 0, single buffered']
    #allocation3 [shape = 's32[1]{0}', space=sflag, size = 0x4, scoped, tag = 'scoped memory for _encode_impl.1']
    %10 = vsyncpa [#allocation3], 0
    // Predicated region
    $region2: #{_encode_impl.1} parent=1 // pred_check
      _
    $region3: #{_encode_impl.1} parent=1 // pred_check_branch
      %12 = sbr.rel (0) target = $region5
    $region4: #{_encode_impl.1} parent=1 // pred_region
      _
    $region5: #{_encode_impl.1} parent=1 // pred_fallthru
      _
    // Predicated region
    $region6: #{_encode_impl.1} parent=1 // pred_check
      _
    $region7: #{_encode_impl.1} parent=1 // pred_check_branch
      %14 = sbr.rel (0) target = $region9
    $region8: #{_encode_impl.1} parent=1 // pred_region
      _
    $region9: #{_encode_impl.1} parent=1 // pred_fallthru
      _
    // Predicated region
    $region10: #{_encode_impl.1} parent=1 // pred_check
      _
    $region11: #{_encode_impl.1} parent=1 // pred_check_branch
      %16 = sbr.rel (0) target = $region13
    $region12: #{_encode_impl.1} parent=1 // pred_region
      _
    $region13: #{_encode_impl.1} parent=1 // pred_fallthru
      _
    // Predicated region
    $region14: #{_encode_impl.1} parent=1 // pred_check
      _
    $region15: #{_encode_impl.1} parent=1 // pred_check_branch
      %18 = sbr.rel (0) target = $region17
    $region16: #{_encode_impl.1} parent=1 // pred_region
      _
    $region17: #{_encode_impl.1} parent=1 // pred_fallthru
      _
    // Predicated region
    $region18: #{_encode_impl.1} parent=1 // pred_check
      _
    $region19: #{_encode_impl.1} parent=1 // pred_check_branch
      %20 = sbr.rel (0) target = $region21
    $region20: #{_encode_impl.1} parent=1 // pred_region
      _
    $region21: #{_encode_impl.1} parent=1 // pred_fallthru
      _
    %v22 = vld [vmem:[%s0] sm:$0xf]
    %v23 = vld [vmem:[%s0 + $0x4] sm:$0xf]
    %v24 = vld [vmem:[%s0 + $0x8] sm:$0xf]
    %v25 = vld [vmem:[%s0 + $0xc] sm:$0xf]
    %v26 = vld [vmem:[%s1] sm:$0xf]
    %v27 = vld [vmem:[%s1 + $0x4] sm:$0xf]
    %v28 = vld [vmem:[%s1 + $0x8] sm:$0xf]
    %v29 = vld [vmem:[%s1 + $0xc] sm:$0xf]
    %v30 = vld [vmem:[%s1 + $0x10] sm:$0xf]
    %v31 = vld [vmem:[%s1 + $0x14] sm:$0xf]
    %v32 = vld [vmem:[%s1 + $0x18] sm:$0xf]
    %v33 = vld [vmem:[%s1 + $0x1c] sm:$0xf]
    %v34 = vld [vmem:[%s1 + $0x20] sm:$0xf]
    %v35 = vld [vmem:[%s1 + $0x24] sm:$0xf]
    %v36 = vld [vmem:[%s1 + $0x28] sm:$0xf]
    %v37 = vld [vmem:[%s1 + $0x2c] sm:$0xf]
    %v38 = vld [vmem:[%s1 + $0x30] sm:$0xf]
    %v39 = vld [vmem:[%s1 + $0x34] sm:$0xf]
    %v40 = vld [vmem:[%s1 + $0x38] sm:$0xf]
    %v41 = vld [vmem:[%s1 + $0x3c] sm:$0xf]
    %v42 = vld [vmem:[%s2] sm:$0x1]
    %v44 = vlaneseq
    %v45 = vshrl.u32 %v44, 7
    %v46 = vsub.s32 0, %v45
    %v47 = vrot.slane %v42, %v46
    %v53 = vunpack.c.l.b16 %v22
    %v54 = vunpack.c.l.b16 %v23
    %v55 = vunpack.c.l.b16 %v24
    %v56 = vunpack.c.l.b16 %v25
    %v57 = vpack.c.b16 %v54, %v53
    %v58 = vpack.c.b16 %v56, %v55
    %v77 = vunpack.c.l.b16 %v26
    %v78 = vunpack.c.l.b16 %v27
    %v79 = vunpack.c.l.b16 %v28
    %v80 = vunpack.c.l.b16 %v29
    %v81 = vunpack.c.l.b16 %v30
    %v82 = vunpack.c.l.b16 %v31
    %v83 = vunpack.c.l.b16 %v32
    %v84 = vunpack.c.l.b16 %v33
    %v85 = vunpack.c.l.b16 %v34
    %v86 = vunpack.c.l.b16 %v35
    %v87 = vunpack.c.l.b16 %v36
    %v88 = vunpack.c.l.b16 %v37
    %v89 = vunpack.c.l.b16 %v38
    %v90 = vunpack.c.l.b16 %v39
    %v91 = vunpack.c.l.b16 %v40
    %v92 = vunpack.c.l.b16 %v41
    %v93 = vpack.c.b16 %v78, %v77
    %v94 = vpack.c.b16 %v80, %v79
    %v95 = vpack.c.b16 %v82, %v81
    %v96 = vpack.c.b16 %v84, %v83
    %v97 = vpack.c.b16 %v86, %v85
    %v98 = vpack.c.b16 %v88, %v87
    %v99 = vpack.c.b16 %v90, %v89
    %v100 = vpack.c.b16 %v92, %v91
    %109 = vmatprep.subr.bf16.mxu0 0
    %110 = vmatpush1.bf16.msra.mxu0 %v100
    %111 = vmatprep.subr.bf16.mxu0 0
    %112 = vmatpush1.bf16.msra.mxu0 %v99
    %113 = vmatprep.subr.bf16.mxu0 0
    %114 = vmatpush1.bf16.msra.mxu0 %v98
    %115 = vmatprep.subr.bf16.mxu0 0
    %116 = vmatpush1.bf16.msra.mxu0 %v97
    %117 = vmatprep.subr.bf16.mxu0 0
    %118 = vmatpush1.bf16.msra.mxu0 %v96
    %119 = vmatprep.subr.bf16.mxu0 0
    %120 = vmatpush1.bf16.msra.mxu0 %v95
    %121 = vmatprep.subr.bf16.mxu0 0
    %122 = vmatpush1.bf16.msra.mxu0 %v94
    %123 = vmatprep.subr.bf16.mxu0 0
    %124 = vmatpush1.bf16.msra.mxu0 %v93
    %125 = vmatprep.subr.bf16.mxu0 0
    %126 = vmatpush2.bf16.msra.mxu0 0
    %127 = vmatprep.subr.bf16.mxu0 0
    %128 = vmatpush2.bf16.msra.mxu0 0
    %129 = vmatprep.subr.bf16.mxu0 0
    %130 = vmatpush2.bf16.msra.mxu0 0
    %131 = vmatprep.subr.bf16.mxu0 0
    %132 = vmatpush2.bf16.msra.mxu0 0
    %133 = vmatprep.subr.bf16.mxu0 0
    %134 = vmatpush2.bf16.msra.mxu0 0
    %135 = vmatprep.subr.bf16.mxu0 0
    %136 = vmatpush2.bf16.msra.mxu0 0
    %137 = vmatprep.subr.bf16.mxu0 0
    %138 = vmatpush2.bf16.msra.mxu0 0
    %139 = vmatprep.subr.bf16.mxu0 0
    %140 = vmatpush2.bf16.msra.mxu0 0
    %141 = vmatprep.mubr.bf16.mxu0 0
    %142 = vmatmul.mubr.bf16.gmra.mxu0 %v57
    %v143 = vpop.f32.mrf.mxu0
    %v144 = vadd.f32 %v47, %v143
    %v145 = vpop.f32.mrf.mxu0
    %v146 = vpop.f32.mrf.mxu0
    %v147 = vadd.f32 %v47, %v146
    %v148 = vpop.f32.mrf.mxu0
    %149 = vmatprep.mubr.bf16.mxu0 0
    %150 = vmatmul.mubr.bf16.gmra.mxu0 %v58
    %v151 = vpop.f32.mrf.mxu0
    %v152 = vadd.f32 %v47, %v151
    %v153 = vpop.f32.mrf.mxu0
    %v154 = vpop.f32.mrf.mxu0
    %v155 = vadd.f32 %v47, %v154
    %v156 = vpop.f32.mrf.mxu0
    %157 = vdwg.mxu0
    %v158 = vmax.f32 %v144, 0.0
    %v159 = vmax.f32 %v147, 0.0
    %v160 = vmax.f32 %v152, 0.0
    %v161 = vmax.f32 %v155, 0.0
    %v162 = vpack.c.bf16 %v159, %v158
    %v163 = vpack.c.bf16 %v161, %v160
    %v164 = vld [vmem:[%s3] sm:$0xf]
    %v165 = vld [vmem:[%s3 + $0x4] sm:$0xf]
    %v166 = vld [vmem:[%s3 + $0x8] sm:$0xf]
    %v167 = vld [vmem:[%s3 + $0xc] sm:$0xf]
    %v168 = vld [vmem:[%s3 + $0x10] sm:$0xf]
    %v169 = vld [vmem:[%s3 + $0x14] sm:$0xf]
    %v170 = vld [vmem:[%s3 + $0x18] sm:$0xf]
    %v171 = vld [vmem:[%s3 + $0x1c] sm:$0xf]
    %v172 = vld [vmem:[%s3 + $0x20] sm:$0xf]
    %v173 = vld [vmem:[%s3 + $0x24] sm:$0xf]
    %v174 = vld [vmem:[%s3 + $0x28] sm:$0xf]
    %v175 = vld [vmem:[%s3 + $0x2c] sm:$0xf]
    %v176 = vld [vmem:[%s3 + $0x30] sm:$0xf]
    %v177 = vld [vmem:[%s3 + $0x34] sm:$0xf]
    %v178 = vld [vmem:[%s3 + $0x38] sm:$0xf]
    %v179 = vld [vmem:[%s3 + $0x3c] sm:$0xf]
    %v180 = vld [vmem:[%s4] sm:$0x1]
    %v182 = vlaneseq
    %v183 = vshrl.u32 %v182, 7
    %v184 = vsub.s32 0, %v183
    %v185 = vrot.slane %v180, %v184
    %v203 = vunpack.c.l.b16 %v164
    %v204 = vunpack.c.l.b16 %v165
    %v205 = vunpack.c.l.b16 %v166
    %v206 = vunpack.c.l.b16 %v167
    %v207 = vunpack.c.l.b16 %v168
    %v208 = vunpack.c.l.b16 %v169
    %v209 = vunpack.c.l.b16 %v170
    %v210 = vunpack.c.l.b16 %v171
    %v211 = vunpack.c.l.b16 %v172
    %v212 = vunpack.c.l.b16 %v173
    %v213 = vunpack.c.l.b16 %v174
    %v214 = vunpack.c.l.b16 %v175
    %v215 = vunpack.c.l.b16 %v176
    %v216 = vunpack.c.l.b16 %v177
    %v217 = vunpack.c.l.b16 %v178
    %v218 = vunpack.c.l.b16 %v179
    %v219 = vpack.c.b16 %v204, %v203
    %v220 = vpack.c.b16 %v206, %v205
    %v221 = vpack.c.b16 %v208, %v207
    %v222 = vpack.c.b16 %v210, %v209
    %v223 = vpack.c.b16 %v212, %v211
    %v224 = vpack.c.b16 %v214, %v213
    %v225 = vpack.c.b16 %v216, %v215
    %v226 = vpack.c.b16 %v218, %v217
    %235 = vmatprep.subr.bf16.mxu0 0
    %236 = vmatpush1.bf16.msra.mxu0 %v226
    %237 = vmatprep.subr.bf16.mxu0 0
    %238 = vmatpush1.bf16.msra.mxu0 %v225
    %239 = vmatprep.subr.bf16.mxu0 0
    %240 = vmatpush1.bf16.msra.mxu0 %v224
    %241 = vmatprep.subr.bf16.mxu0 0
    %242 = vmatpush1.bf16.msra.mxu0 %v223
    %243 = vmatprep.subr.bf16.mxu0 0
    %244 = vmatpush1.bf16.msra.mxu0 %v222
    %245 = vmatprep.subr.bf16.mxu0 0
    %246 = vmatpush1.bf16.msra.mxu0 %v221
    %247 = vmatprep.subr.bf16.mxu0 0
    %248 = vmatpush1.bf16.msra.mxu0 %v220
    %249 = vmatprep.subr.bf16.mxu0 0
    %250 = vmatpush1.bf16.msra.mxu0 %v219
    %251 = vmatprep.subr.bf16.mxu0 0
    %252 = vmatpush2.bf16.msra.mxu0 0
    %253 = vmatprep.subr.bf16.mxu0 0
    %254 = vmatpush2.bf16.msra.mxu0 0
    %255 = vmatprep.subr.bf16.mxu0 0
    %256 = vmatpush2.bf16.msra.mxu0 0
    %257 = vmatprep.subr.bf16.mxu0 0
    %258 = vmatpush2.bf16.msra.mxu0 0
    %259 = vmatprep.subr.bf16.mxu0 0
    %260 = vmatpush2.bf16.msra.mxu0 0
    %261 = vmatprep.subr.bf16.mxu0 0
    %262 = vmatpush2.bf16.msra.mxu0 0
    %263 = vmatprep.subr.bf16.mxu0 0
    %264 = vmatpush2.bf16.msra.mxu0 0
    %265 = vmatprep.subr.bf16.mxu0 0
    %266 = vmatpush2.bf16.msra.mxu0 0
    %267 = vmatprep.mubr.bf16.mxu0 0
    %268 = vmatmul.mubr.bf16.gmra.mxu0 %v162
    %v269 = vpop.f32.mrf.mxu0
    %v270 = vadd.f32 %v185, %v269
    %v271 = vpop.f32.mrf.mxu0
    %v272 = vpop.f32.mrf.mxu0
    %v273 = vadd.f32 %v185, %v272
    %v274 = vpop.f32.mrf.mxu0
    %275 = vmatprep.mubr.bf16.mxu0 0
    %276 = vmatmul.mubr.bf16.gmra.mxu0 %v163
    %v277 = vpop.f32.mrf.mxu0
    %v278 = vadd.f32 %v185, %v277
    %v279 = vpop.f32.mrf.mxu0
    %v280 = vpop.f32.mrf.mxu0
    %v281 = vadd.f32 %v185, %v280
    %v282 = vpop.f32.mrf.mxu0
    %283 = vdwg.mxu0
    %284 = vst [vmem:[#allocation2] sm:$0xff] %v270
    %285 = vst [vmem:[#allocation2 + $0x8] sm:$0xff] %v273
    %286 = vst [vmem:[#allocation2 + $0x10] sm:$0xff] %v278
    %287 = vst [vmem:[#allocation2 + $0x18] sm:$0xff] %v281
    // Predicated region
    $region22: #{_encode_impl.1} parent=1 // pred_check
      _
    $region23: #{_encode_impl.1} parent=1 // pred_check_branch
      %289 = sbr.rel (0) target = $region25
    $region24: #{_encode_impl.1} parent=1 // pred_region
      %s291 = ssub.s32 512, 512
      %292 = vsyncadd [#allocation3], %s291
      %s293 = sshll.u32 [#allocation2], 4
      %s294 = int_to_ptr.vmem [resolvable:$true] %s293
      %299 = dma.vmem_to_hbm [thread:$0]  %s294, 512, %s5, [#allocation3], 128, 128, 8
    $region25: #{_encode_impl.1} parent=1 // pred_fallthru
      _
    // Predicated region
    $region26: #{_encode_impl.1} parent=1 // pred_check
      _
    $region27: #{_encode_impl.1} parent=1 // pred_check_branch
      %301 = sbr.rel (0) target = $region29
    $region28: #{_encode_impl.1} parent=1 // pred_region
      %302 = dma.done [#allocation3], 512
    $region29: #{_encode_impl.1} parent=1 // pred_fallthru
      _
    %303 = vsyncpa [#allocation3], 1

</llo_original>
